<compile_context>
chip_gen: v7x
topology: tpu7x:2x2x1
jax: 0.10.0
libtpu: 0.0.40
codegen_flags: <defaults>
</compile_context>

<pallas_src>
import functools

import jax
import jax.numpy as jnp
from jax.experimental import pallas as pl
from jax.experimental.pallas import tpu as pltpu


def _round_up(x: int, m: int) -> int:
    return ((x + m - 1) // m) * m


def _pick_block_s(seq_len, h_pad, itemsize, n_row_streams, vmem_budget_bytes):
    """Largest multiple-of-8 S tile whose double-buffered row streams plus the
    resident (H,H) weight fit inside the VMEM budget."""
    resident = 2 * h_pad * h_pad * itemsize + 16 * h_pad * 4   # W (2 bufs) + b/vt/out/acc
    per_row = 2 * n_row_streams * h_pad * itemsize             # double-buffered enc (+dec)
    avail = max(vmem_budget_bytes - resident, per_row * 8)
    bs = (avail // per_row) // 8 * 8
    return max(8, min(int(bs), 2048, _round_up(seq_len, 8)))


def _attn_concat_kernel(enc_ref, dec_ref, w_ref, b_ref, vt_ref, ctx_ref,
                        m_sc, l_sc, acc_sc, *, seq_len, block_s):
    i = pl.program_id(0)

    @pl.when(i == 0)
    def _init():
        m_sc[...] = jnp.full_like(m_sc, -1e30)   # avoid -inf (inf-inf NaN) on masked tiles
        l_sc[...] = jnp.zeros_like(l_sc)
        acc_sc[...] = jnp.zeros_like(acc_sc)

    enc = enc_ref[...]                            # (tS, Hp) in mxu dtype
    x = enc + dec_ref[...]                        # dec is (1,Hp) or (tS,Hp): broadcasts

    # Linear: x @ W^T + b (contract last dims of both -> no wrapper transpose), tanh in f32.
    scores = jnp.tanh(
        jax.lax.dot_general(
            x, w_ref[...],
            dimension_numbers=(((1,), (1,)), ((), ())),
            preferred_element_type=jnp.float32,
        ) + b_ref[...]
    )                                             # (tS, Hp) f32

    # Attention logits as a row vector on the MXU: vt @ scores^T -> (1, tS).
    logits = jax.lax.dot_general(
        vt_ref[...], scores,
        dimension_numbers=(((1,), (1,)), ((), ())),
        preferred_element_type=jnp.float32,
    )                                             # (1, tS) f32

    # Mask padded sequence positions so they get zero attention weight.
    col = jax.lax.broadcasted_iota(jnp.int32, (1, block_s), 1)
    valid = (i * block_s + col) < seq_len
    logits = jnp.where(valid, logits, -1e30)

    # Online-softmax update.
    m_prev = m_sc[...]                                                  # (1,1)
    m_new = jnp.maximum(m_prev, jnp.max(logits, axis=-1, keepdims=True))
    alpha = jnp.exp(m_prev - m_new)                                     # (1,1)
    p = jnp.exp(logits - m_new)                                         # (1, tS)
    l_sc[...] = alpha * l_sc[...] + jnp.sum(p, axis=-1, keepdims=True)
    # Context accumulation on the MXU: (1,tS) @ (tS,Hp) -> (1,Hp).
    acc_sc[...] = alpha * acc_sc[...] + jnp.dot(
        p.astype(enc.dtype), enc, preferred_element_type=jnp.float32)
    m_sc[...] = m_new

    @pl.when(i == pl.num_programs(0) - 1)
    def _finalize():
        l = l_sc[...]
        inv = pl.reciprocal(l, approx=True)       # EUP reciprocal
        inv = inv * (2.0 - l * inv)               # one Newton step -> ~f32 accuracy
        ctx_ref[...] = (acc_sc[...] * inv).astype(ctx_ref.dtype)


def attention_concat(output_enc, hidden_dec, w, b, vt, *,
                     mxu_dtype=jnp.float32,
                     block_s=None,
                     vmem_budget_bytes=32 * 1024 * 1024):
    """output_enc: (1, S, H); hidden_dec: (1, 1, H) or (1, S, H);
    w: (H, H) torch Linear weight (out, in); b: (H,); vt: (1, H).
    mxu_dtype: operand dtype fed to the MXU (bf16 on v6e/v7x, f32 on v5e).
    Returns ctx_vec of shape (1, 1, H), float32."""
    assert output_enc.ndim == 3 and output_enc.shape[0] == 1, "bmm path requires batch == 1"
    _, S, H = output_enc.shape
    assert hidden_dec.shape[0] == 1 and hidden_dec.shape[2] == H
    assert hidden_dec.shape[1] in (1, S), "hidden_dec seq dim must be 1 or S"
    per_position_dec = (hidden_dec.shape[1] == S) and (S != 1)

    h_pad = _round_up(H, 128)
    itemsize = jnp.dtype(mxu_dtype).itemsize
    n_row_streams = 2 if per_position_dec else 1
    if block_s is None:
        block_s = _pick_block_s(S, h_pad, itemsize, n_row_streams, vmem_budget_bytes)
    else:
        block_s = max(8, _round_up(int(block_s), 8))
    s_pad = _round_up(S, block_s)
    grid = (s_pad // block_s,)

    # Pad to lane/sublane-aligned slabs. Padded H lanes are inert (zero W
    # columns / zero vt); padded S rows are masked inside the kernel.
    enc = jnp.pad(output_enc.reshape(S, H).astype(mxu_dtype),
                  ((0, s_pad - S), (0, h_pad - H)))
    if per_position_dec:
        dec = jnp.pad(hidden_dec.reshape(S, H).astype(mxu_dtype),
                      ((0, s_pad - S), (0, h_pad - H)))
        dec_spec = pl.BlockSpec((block_s, h_pad), lambda i: (i, 0))
    else:
        dec = jnp.pad(hidden_dec.reshape(1, H).astype(mxu_dtype),
                      ((0, 0), (0, h_pad - H)))
        dec_spec = pl.BlockSpec((1, h_pad), lambda i: (0, 0))

    w_p = jnp.pad(jnp.asarray(w, mxu_dtype), ((0, h_pad - H), (0, h_pad - H)))
    b_p = jnp.pad(jnp.asarray(b, jnp.float32).reshape(1, H), ((0, 0), (0, h_pad - H)))
    vt_p = jnp.pad(jnp.asarray(vt, jnp.float32).reshape(1, H), ((0, 0), (0, h_pad - H)))

    # Advisory cost estimate so XLA can schedule surrounding decode-loop ops.
    cost = pl.CostEstimate(
        flops=2 * s_pad * h_pad * h_pad + 4 * s_pad * h_pad,
        transcendentals=s_pad * h_pad + 2 * s_pad,
        bytes_accessed=int((n_row_streams * s_pad * h_pad + h_pad * h_pad) * itemsize
                           + 3 * h_pad * 4),
    )
    vmem_est = (2 * h_pad * h_pad * itemsize
                + 2 * n_row_streams * block_s * h_pad * itemsize
                + 8 * h_pad * 4)
    vmem_limit = int(min(max(2 * vmem_est, 16 * 1024 * 1024), 64 * 1024 * 1024))

    kernel = functools.partial(_attn_concat_kernel, seq_len=S, block_s=block_s)
    ctx = pl.pallas_call(
        kernel,
        out_shape=jax.ShapeDtypeStruct((1, h_pad), jnp.float32),
        grid_spec=pltpu.PrefetchScalarGridSpec(
            num_scalar_prefetch=0,
            grid=grid,
            in_specs=[
                pl.BlockSpec((block_s, h_pad), lambda i: (i, 0)),   # enc tile (pipelined)
                dec_spec,                                           # decoder state
                pl.BlockSpec((h_pad, h_pad), lambda i: (0, 0)),     # W       (resident)
                pl.BlockSpec((1, h_pad), lambda i: (0, 0)),         # bias    (resident)
                pl.BlockSpec((1, h_pad), lambda i: (0, 0)),         # vt      (resident)
            ],
            out_specs=pl.BlockSpec((1, h_pad), lambda i: (0, 0)),   # lane-dense output
            scratch_shapes=[
                pltpu.VMEM((1, 1), jnp.float32),      # running max m
                pltpu.VMEM((1, 1), jnp.float32),      # running denom l
                pltpu.VMEM((1, h_pad), jnp.float32),  # running context acc
            ],
        ),
        compiler_params=pltpu.CompilerParams(
            dimension_semantics=("arbitrary",),       # sequential online-softmax reduction
            vmem_limit_bytes=vmem_limit,
        ),
        cost_estimate=cost,
    )(enc, dec, w_p, b_p, vt_p)

    return ctx[:, :H].reshape(1, 1, H)


def _reference(output_enc, hidden_dec, w, b, vt):
    """Pure-JAX reference mirroring the PyTorch forward (full-precision matmuls)."""
    x = hidden_dec + output_enc                                           # (1, S, H)
    scores = jnp.tanh(jnp.einsum("bsh,oh->bso", x, w, precision="highest") + b)
    logits = jnp.einsum("bsh,h->bs", scores, vt[0], precision="highest")  # (1, S)
    attn_w = jax.nn.softmax(logits.reshape(1, -1), axis=-1)               # (1, S)
    ctx = jnp.einsum("bs,bsh->bh", attn_w, output_enc, precision="highest")
    return ctx.reshape(1, 1, -1)


if __name__ == "__main__":
    H = 32
    key = jax.random.PRNGKey(0)
    k1, k2, k3, k4, k5, k6 = jax.random.split(key, 6)

    # "parameters" (same shapes as the torch module's __init__)
    w = jax.random.normal(k1, (H, H), jnp.float32) * 0.1    # Linear weight (H_out, H_in)
    b = jax.random.normal(k2, (H,), jnp.float32) * 0.1      # Linear bias
    vt = jax.random.normal(k3, (1, H), jnp.float32) * 0.1   # vt parameter

    # Error thresholds leave headroom for MXU bf16-pass emulation of f32 matmuls
    # on some backends and for bf16 operand rounding; semantic bugs (dropped
    # decoder state, wrong softmax axis, bad masking) produce O(0.1-1) errors.

    # Case 1: canonical seq2seq step — S=8, hidden_dec (1,1,H), f32 MXU operands (v5e path).
    S = 8
    output_enc = jax.random.normal(k4, (1, S, H), jnp.float32)
    hidden_dec = jax.random.normal(k5, (1, 1, H), jnp.float32)
    ref = _reference(output_enc, hidden_dec, w, b, vt)
    ctx = jax.block_until_ready(
        attention_concat(output_enc, hidden_dec, w, b, vt, mxu_dtype=jnp.float32))
    assert ctx.shape == (1, 1, H), ctx.shape
    err = float(jnp.max(jnp.abs(ctx - ref)))
    assert err < 2e-2, f"f32 path max err {err}"

    # Case 2: bf16 MXU operands (v6e/v7x fast path; stats stay f32).
    ctx_bf16 = jax.block_until_ready(
        attention_concat(output_enc, hidden_dec, w, b, vt, mxu_dtype=jnp.bfloat16))
    err = float(jnp.max(jnp.abs(ctx_bf16 - ref)))
    assert err < 6e-2, f"bf16 path max err {err}"

    # Case 3: per-position hidden_dec (1,S,H) — the branch that was broken before.
    hidden_dec_full = jax.random.normal(k6, (1, S, H), jnp.float32)
    ref_full = _reference(output_enc, hidden_dec_full, w, b, vt)
    ctx_full = jax.block_until_ready(
        attention_concat(output_enc, hidden_dec_full, w, b, vt, mxu_dtype=jnp.float32))
    err = float(jnp.max(jnp.abs(ctx_full - ref_full)))
    assert err < 2e-2, f"per-position-dec path max err {err}"

    # Case 4: longer, non-multiple-of-8 sequence forced onto several grid steps
    # (exercises the online-softmax accumulation and padded-row masking).
    S2 = 45
    enc2 = jax.random.normal(jax.random.PRNGKey(7), (1, S2, H), jnp.float32)
    dec2 = jax.random.normal(jax.random.PRNGKey(8), (1, 1, H), jnp.float32)
    ref2 = _reference(enc2, dec2, w, b, vt)
    ctx2 = jax.block_until_ready(
        attention_concat(enc2, dec2, w, b, vt, mxu_dtype=jnp.float32, block_s=16))
    err = float(jnp.max(jnp.abs(ctx2 - ref2)))
    assert err < 2e-2, f"tiled path max err {err}"

    print("KERNEL_OK")
</pallas_src>

<mosaic_0001>
module attributes {stable_mosaic.version = 11 : i64} {
  func.func @_attn_concat_kernel(%arg0: i32, %arg1: memref<8x128xf32, #tpu.memory_space<vmem>>, %arg2: memref<1x128xf32, #tpu.memory_space<vmem>>, %arg3: memref<128x128xf32, #tpu.memory_space<vmem>>, %arg4: memref<1x128xf32, #tpu.memory_space<vmem>>, %arg5: memref<1x128xf32, #tpu.memory_space<vmem>>, %arg6: memref<1x128xf32, #tpu.memory_space<vmem>>, %arg7: memref<1x1xf32, #tpu.memory_space<vmem>>, %arg8: memref<1x1xf32, #tpu.memory_space<vmem>>, %arg9: memref<1x128xf32, #tpu.memory_space<vmem>>) attributes {dimension_semantics = [#tpu.dimension_semantics<arbitrary>], iteration_bounds = array<i64: 1>, scalar_prefetch = 0 : i64, scratch_operands = 3 : i64, tpu.core_type = #tpu.core_type<tc>, window_params = [{transform_indices = @transform_0, window_bounds = array<i64: 8, 128>}, {pipeline_mode = #tpu.pipeline_mode<synchronous>, transform_indices = @transform_1, window_bounds = array<i64: 1, 128>}, {pipeline_mode = #tpu.pipeline_mode<synchronous>, transform_indices = @transform_2, window_bounds = array<i64: 128, 128>}, {pipeline_mode = #tpu.pipeline_mode<synchronous>, transform_indices = @transform_3, window_bounds = array<i64: 1, 128>}, {pipeline_mode = #tpu.pipeline_mode<synchronous>, transform_indices = @transform_4, window_bounds = array<i64: 1, 128>}, {pipeline_mode = #tpu.pipeline_mode<synchronous>, transform_indices = @transform_5, window_bounds = array<i64: 1, 128>}]} {
    %c0_i32 = arith.constant 0 : i32
    %0 = arith.cmpi eq, %arg0, %c0_i32 : i32
    %1 = arith.extui %0 : i1 to i32
    %c0_i32_0 = arith.constant 0 : i32
    %2 = arith.cmpi ne, %1, %c0_i32_0 : i32
    scf.if %2 {
      %cst_30 = arith.constant -1.000000e+30 : f32
      %48 = vector.broadcast %cst_30 : f32 to vector<1x1xf32>
      %c0_31 = arith.constant 0 : index
      %c0_32 = arith.constant 0 : index
      %49 = vector.load %arg7[%c0_31, %c0_32] : memref<1x1xf32, #tpu.memory_space<vmem>>, vector<1x1xf32>
      tpu.vector_store %arg7[%c0_31, %c0_32], %48 {strides = array<i32>} : memref<1x1xf32, #tpu.memory_space<vmem>>, vector<1x1xf32>,
      %cst_33 = arith.constant 0.000000e+00 : f32
      %50 = vector.broadcast %cst_33 : f32 to vector<1x1xf32>
      %c0_34 = arith.constant 0 : index
      %c0_35 = arith.constant 0 : index
      %51 = vector.load %arg8[%c0_34, %c0_35] : memref<1x1xf32, #tpu.memory_space<vmem>>, vector<1x1xf32>
      tpu.vector_store %arg8[%c0_34, %c0_35], %50 {strides = array<i32>} : memref<1x1xf32, #tpu.memory_space<vmem>>, vector<1x1xf32>,
      %cst_36 = arith.constant 0.000000e+00 : f32
      %52 = vector.broadcast %cst_36 : f32 to vector<1x128xf32>
      %c0_37 = arith.constant 0 : index
      %c0_38 = arith.constant 0 : index
      %53 = vector.load %arg9[%c0_37, %c0_38] : memref<1x128xf32, #tpu.memory_space<vmem>>, vector<1x128xf32>
      tpu.vector_store %arg9[%c0_37, %c0_38], %52 {strides = array<i32>} : memref<1x128xf32, #tpu.memory_space<vmem>>, vector<1x128xf32>,
    } else {
    }
    %c0 = arith.constant 0 : index
    %c0_1 = arith.constant 0 : index
    %3 = vector.load %arg1[%c0, %c0_1] : memref<8x128xf32, #tpu.memory_space<vmem>>, vector<8x128xf32>
    %c0_2 = arith.constant 0 : index
    %c0_3 = arith.constant 0 : index
    %4 = vector.load %arg2[%c0_2, %c0_3] : memref<1x128xf32, #tpu.memory_space<vmem>>, vector<1x128xf32>
    %5 = vector.broadcast %4 : vector<1x128xf32> to vector<8x128xf32>
    %6 = arith.addf %3, %5 : vector<8x128xf32>
    %c0_4 = arith.constant 0 : index
    %c0_5 = arith.constant 0 : index
    %7 = vector.load %arg3[%c0_4, %c0_5] : memref<128x128xf32, #tpu.memory_space<vmem>>, vector<128x128xf32>
    %cst = arith.constant dense<0.000000e+00> : vector<8x128xf32>
    %8 = tpu.matmul %6, %7, %cst {dimension_numbers = #tpu.dot_dimension_numbers<[1], [1], [0], [0], [0, 0, 1, 0], [], []>} : vector<8x128xf32>, vector<128x128xf32>, vector<8x128xf32> -> vector<8x128xf32>
    %c0_6 = arith.constant 0 : index
    %c0_7 = arith.constant 0 : index
    %9 = vector.load %arg4[%c0_6, %c0_7] : memref<1x128xf32, #tpu.memory_space<vmem>>, vector<1x128xf32>
    %10 = vector.broadcast %9 : vector<1x128xf32> to vector<8x128xf32>
    %11 = arith.addf %8, %10 : vector<8x128xf32>
    %12 = math.tanh %11 : vector<8x128xf32>
    %c0_8 = arith.constant 0 : index
    %c0_9 = arith.constant 0 : index
    %13 = vector.load %arg5[%c0_8, %c0_9] : memref<1x128xf32, #tpu.memory_space<vmem>>, vector<1x128xf32>
    %cst_10 = arith.constant dense<0.000000e+00> : vector<1x8xf32>
    %14 = tpu.matmul %13, %12, %cst_10 {dimension_numbers = #tpu.dot_dimension_numbers<[1], [1], [0], [0], [0, 0, 1, 0], [], []>} : vector<1x128xf32>, vector<8x128xf32>, vector<1x8xf32> -> vector<1x8xf32>
    %15 = tpu.iota {dimensions = array<i32: 1>} : vector<1x8xi32>
    %c8_i32 = arith.constant 8 : i32
    %16 = arith.muli %arg0, %c8_i32 : i32
    %17 = vector.broadcast %16 : i32 to vector<1x8xi32>
    %18 = arith.addi %17, %15 : vector<1x8xi32>
    %c8_i32_11 = arith.constant 8 : i32
    %19 = vector.broadcast %c8_i32_11 : i32 to vector<1x8xi32>
    %20 = arith.cmpi slt, %18, %19 : vector<1x8xi32>
    %cst_12 = arith.constant -1.000000e+30 : f32
    %21 = vector.broadcast %cst_12 : f32 to vector<1x8xf32>
    %22 = arith.select %20, %14, %21 : vector<1x8xi1>, vector<1x8xf32>
    %c0_13 = arith.constant 0 : index
    %c0_14 = arith.constant 0 : index
    %23 = vector.load %arg7[%c0_13, %c0_14] : memref<1x1xf32, #tpu.memory_space<vmem>>, vector<1x1xf32>
    %cst_15 = arith.constant dense<0xFF800000> : vector<1xf32>
    %24 = vector.multi_reduction <maximumf>, %22, %cst_15 [1] : vector<1x8xf32> to vector<1xf32>
    %25 = vector.shape_cast %24 : vector<1xf32> to vector<1x1xf32>
    %26 = arith.maximumf %23, %25 : vector<1x1xf32>
    %27 = arith.subf %23, %26 : vector<1x1xf32>
    %28 = math.exp %27 : vector<1x1xf32>
    %29 = vector.broadcast %26 : vector<1x1xf32> to vector<1x8xf32>
    %30 = arith.subf %22, %29 : vector<1x8xf32>
    %31 = math.exp %30 : vector<1x8xf32>
    %c0_16 = arith.constant 0 : index
    %c0_17 = arith.constant 0 : index
    %32 = vector.load %arg8[%c0_16, %c0_17] : memref<1x1xf32, #tpu.memory_space<vmem>>, vector<1x1xf32>
    %33 = arith.mulf %28, %32 : vector<1x1xf32>
    %cst_18 = arith.constant dense<0.000000e+00> : vector<1xf32>
    %34 = vector.multi_reduction <add>, %31, %cst_18 [1] : vector<1x8xf32> to vector<1xf32>
    %35 = vector.shape_cast %34 : vector<1xf32> to vector<1x1xf32>
    %36 = arith.addf %33, %35 : vector<1x1xf32>
    %c0_19 = arith.constant 0 : index
    %c0_20 = arith.constant 0 : index
    %37 = vector.load %arg8[%c0_19, %c0_20] : memref<1x1xf32, #tpu.memory_space<vmem>>, vector<1x1xf32>
    tpu.vector_store %arg8[%c0_19, %c0_20], %36 {strides = array<i32>} : memref<1x1xf32, #tpu.memory_space<vmem>>, vector<1x1xf32>,
    %c0_21 = arith.constant 0 : index
    %c0_22 = arith.constant 0 : index
    %38 = vector.load %arg9[%c0_21, %c0_22] : memref<1x128xf32, #tpu.memory_space<vmem>>, vector<1x128xf32>
    %39 = vector.broadcast %28 : vector<1x1xf32> to vector<1x128xf32>
    %40 = arith.mulf %39, %38 : vector<1x128xf32>
    %cst_23 = arith.constant dense<0.000000e+00> : vector<1x128xf32>
    %41 = tpu.matmul %31, %3, %cst_23 {dimension_numbers = #tpu.dot_dimension_numbers<[1], [0], [0], [1], [0, 0, 1, 1], [], []>} : vector<1x8xf32>, vector<8x128xf32>, vector<1x128xf32> -> vector<1x128xf32>
    %42 = arith.addf %40, %41 : vector<1x128xf32>
    %c0_24 = arith.constant 0 : index
    %c0_25 = arith.constant 0 : index
    %43 = vector.load %arg9[%c0_24, %c0_25] : memref<1x128xf32, #tpu.memory_space<vmem>>, vector<1x128xf32>
    tpu.vector_store %arg9[%c0_24, %c0_25], %42 {strides = array<i32>} : memref<1x128xf32, #tpu.memory_space<vmem>>, vector<1x128xf32>,
    %c0_26 = arith.constant 0 : index
    %c0_27 = arith.constant 0 : index
    %44 = vector.load %arg7[%c0_26, %c0_27] : memref<1x1xf32, #tpu.memory_space<vmem>>, vector<1x1xf32>
    tpu.vector_store %arg7[%c0_26, %c0_27], %26 {strides = array<i32>} : memref<1x1xf32, #tpu.memory_space<vmem>>, vector<1x1xf32>,
    %c0_i32_28 = arith.constant 0 : i32
    %45 = arith.cmpi eq, %arg0, %c0_i32_28 : i32
    %46 = arith.extui %45 : i1 to i32
    %c0_i32_29 = arith.constant 0 : i32
    %47 = arith.cmpi ne, %46, %c0_i32_29 : i32
    scf.if %47 {
      %c0_30 = arith.constant 0 : index
      %c0_31 = arith.constant 0 : index
      %48 = vector.load %arg8[%c0_30, %c0_31] : memref<1x1xf32, #tpu.memory_space<vmem>>, vector<1x1xf32>
      %49 = tpu.reciprocal %48 {approx = true} : vector<1x1xf32> -> vector<1x1xf32>
      %50 = arith.mulf %48, %49 : vector<1x1xf32>
      %cst_32 = arith.constant 2.000000e+00 : f32
      %51 = vector.broadcast %cst_32 : f32 to vector<1x1xf32>
      %52 = arith.subf %51, %50 : vector<1x1xf32>
      %53 = arith.mulf %49, %52 : vector<1x1xf32>
      %c0_33 = arith.constant 0 : index
      %c0_34 = arith.constant 0 : index
      %54 = vector.load %arg9[%c0_33, %c0_34] : memref<1x128xf32, #tpu.memory_space<vmem>>, vector<1x128xf32>
      %55 = vector.broadcast %53 : vector<1x1xf32> to vector<1x128xf32>
      %56 = arith.mulf %54, %55 : vector<1x128xf32>
      %c0_35 = arith.constant 0 : index
      %c0_36 = arith.constant 0 : index
      %57 = vector.load %arg6[%c0_35, %c0_36] : memref<1x128xf32, #tpu.memory_space<vmem>>, vector<1x128xf32>
      tpu.vector_store %arg6[%c0_35, %c0_36], %56 {strides = array<i32>} : memref<1x128xf32, #tpu.memory_space<vmem>>, vector<1x128xf32>,
    } else {
    }
    return
  }
  func.func @transform_0(%arg0: i32) -> (i32, i32) {
    %c0_i32 = arith.constant 0 : i32
    %c0_i32_0 = arith.constant 0 : i32
    return %arg0, %c0_i32 : i32, i32
  }
  func.func @transform_1(%arg0: i32) -> (i32, i32) {
    %c0_i32 = arith.constant 0 : i32
    %c0_i32_0 = arith.constant 0 : i32
    %c0_i32_1 = arith.constant 0 : i32
    return %c0_i32, %c0_i32_0 : i32, i32
  }
  func.func @transform_2(%arg0: i32) -> (i32, i32) {
    %c0_i32 = arith.constant 0 : i32
    %c0_i32_0 = arith.constant 0 : i32
    %c0_i32_1 = arith.constant 0 : i32
    return %c0_i32, %c0_i32_0 : i32, i32
  }
  func.func @transform_3(%arg0: i32) -> (i32, i32) {
    %c0_i32 = arith.constant 0 : i32
    %c0_i32_0 = arith.constant 0 : i32
    %c0_i32_1 = arith.constant 0 : i32
    return %c0_i32, %c0_i32_0 : i32, i32
  }
  func.func @transform_4(%arg0: i32) -> (i32, i32) {
    %c0_i32 = arith.constant 0 : i32
    %c0_i32_0 = arith.constant 0 : i32
    %c0_i32_1 = arith.constant 0 : i32
    return %c0_i32, %c0_i32_0 : i32, i32
  }
  func.func @transform_5(%arg0: i32) -> (i32, i32) {
    %c0_i32 = arith.constant 0 : i32
    %c0_i32_0 = arith.constant 0 : i32
    %c0_i32_1 = arith.constant 0 : i32
    return %c0_i32, %c0_i32_0 : i32, i32
  }
}

</mosaic_0001>

<llo_original>
// kernel: tpu_custom_call.1
$region0: #{tpu_custom_call.1}
  #allocation0 [shape = 'u32[]', space=smem, size = 0x4, offset = 0x4, fixed_abs, tag = 'smem constant byte address 0x4 - core index']
  #allocation1 [shape = 'u32[144,128]{1,0:T(1,128)}', space=vmem, size = 0x12000, scoped, tag = 'internal scratch']
  #allocation2 [shape = 'f32[1,1]{1,0:T(1,128)}', space=vmem, size = 0x200, scoped, tag = 'scratch operand']
  #allocation3 [shape = 'f32[1,1]{1,0:T(1,128)}', space=vmem, size = 0x200, scoped, tag = 'scratch operand']
  #allocation4 [shape = 'f32[1,128]{1,0:T(1,128)}', space=vmem, size = 0x200, scoped, tag = 'scratch operand']
  %s0 = inlined_call_operand.hbm [shape: f32[8,128], index: 0, kind: input, shape index: {}]
  %s1 = inlined_call_operand.vmem [shape: f32[1,128], index: 1, kind: input, shape index: {}]
  %s2 = inlined_call_operand.hbm [shape: f32[128,128], index: 2, kind: input, shape index: {}]
  %s3 = inlined_call_operand.vmem [shape: f32[1,128], index: 3, kind: input, shape index: {}]
  %s4 = inlined_call_operand.vmem [shape: f32[1,128], index: 4, kind: input, shape index: {}]
  %s5 = inlined_call_operand.hbm [shape: f32[1,128], index: 5, kind: output, shape index: {}]
  %s6 = sld [smem:[#allocation0]]
  $region46: #{tpu_custom_call.1} parent=0
    _
  %s8 = ssub.s32 1, %s6
  %s9 = scalar_select 0, %s8, %s6
  $region1: #{tpu_custom_call.1} parent=0
    #allocation5 [shape = 'u8[4096]{0}', space=vmem, size = 0x1000, scoped, tag = 'input window, operand 0, single buffered']
    #allocation6 [shape = 's32[1]{0}', space=sflag, size = 0x4, scoped, tag = 'scoped memory for tpu_custom_call.1']
    #allocation7 [shape = 's32[1]{0}', space=sflag, size = 0x4, scoped, tag = 'scoped memory for tpu_custom_call.1']
    #allocation8 [shape = 'u8[65536]{0}', space=vmem, size = 0x10000, scoped, tag = 'input window, operand 2, single buffered']
    #allocation9 [shape = 's32[1]{0}', space=sflag, size = 0x4, scoped, tag = 'scoped memory for tpu_custom_call.1']
    #allocation10 [shape = 'u8[512]{0}', space=vmem, size = 0x400, scoped, tag = 'output window, operand 0, single buffered']
    %10 = vsyncpa [#allocation6], 0
    %11 = vsyncpa [#allocation9], 0
    %12 = vsyncpa [#allocation7], 0
    // Predicated region
    $region2: #{tpu_custom_call.1} parent=1 // pred_check
      _
    $region3: #{tpu_custom_call.1} parent=1 // pred_check_branch
      %14 = sbr.rel (0) target = $region5
    $region4: #{tpu_custom_call.1} parent=1 // pred_region
      %s16 = ssub.s32 128, 128
      %17 = vsyncadd [#allocation6], %s16
      %s19 = sshll.u32 [#allocation5], 4
      %s20 = int_to_ptr.vmem [resolvable:$true] %s19
      %22 = dma.hbm_to_vmem [thread:$0]  %s0, 128, %s20, [#allocation6]
    $region5: #{tpu_custom_call.1} parent=1 // pred_fallthru
      _
    // Predicated region
    $region6: #{tpu_custom_call.1} parent=1 // pred_check
      _
    $region7: #{tpu_custom_call.1} parent=1 // pred_check_branch
      %24 = sbr.rel (0) target = $region9
    $region8: #{tpu_custom_call.1} parent=1 // pred_region
      _
    $region9: #{tpu_custom_call.1} parent=1 // pred_fallthru
      _
    // Predicated region
    $region10: #{tpu_custom_call.1} parent=1 // pred_check
      _
    $region11: #{tpu_custom_call.1} parent=1 // pred_check_branch
      %26 = sbr.rel (0) target = $region13
    $region12: #{tpu_custom_call.1} parent=1 // pred_region
      %s28 = ssub.s32 2048, 2048
      %29 = vsyncadd [#allocation9], %s28
      %s30 = sshll.u32 [#allocation8], 4
      %s31 = int_to_ptr.vmem [resolvable:$true] %s30
      %36 = dma.hbm_to_vmem [thread:$0]  %s2, 2048, %s31, [#allocation9], 128, 128, 8
    $region13: #{tpu_custom_call.1} parent=1 // pred_fallthru
      _
    // Predicated region
    $region14: #{tpu_custom_call.1} parent=1 // pred_check
      _
    $region15: #{tpu_custom_call.1} parent=1 // pred_check_branch
      %38 = sbr.rel (0) target = $region17
    $region16: #{tpu_custom_call.1} parent=1 // pred_region
      _
    $region17: #{tpu_custom_call.1} parent=1 // pred_fallthru
      _
    // Predicated region
    $region18: #{tpu_custom_call.1} parent=1 // pred_check
      _
    $region19: #{tpu_custom_call.1} parent=1 // pred_check_branch
      %40 = sbr.rel (0) target = $region21
    $region20: #{tpu_custom_call.1} parent=1 // pred_region
      _
    $region21: #{tpu_custom_call.1} parent=1 // pred_fallthru
      _
    // Predicated region
    $region22: #{tpu_custom_call.1} parent=1 // pred_check
      _
    $region23: #{tpu_custom_call.1} parent=1 // pred_check_branch
      %42 = sbr.rel (0) target = $region25
    $region24: #{tpu_custom_call.1} parent=1 // pred_region
      %43 = dma.done [#allocation6], 128
    $region25: #{tpu_custom_call.1} parent=1 // pred_fallthru
      _
    // Predicated region
    $region26: #{tpu_custom_call.1} parent=1 // pred_check
      _
    $region27: #{tpu_custom_call.1} parent=1 // pred_check_branch
      %45 = sbr.rel (0) target = $region29
    $region28: #{tpu_custom_call.1} parent=1 // pred_region
      %46 = dma.done [#allocation9], 2048
    $region29: #{tpu_custom_call.1} parent=1 // pred_fallthru
      _
    %p47 = scmp.eq.s32.totalorder 0, 0
    // Predicated region
    $region30: #{tpu_custom_call.1} parent=1 // pred_check
      %p48 = pneg %p47
    $region31: #{tpu_custom_call.1} parent=1 // pred_check_branch
      %50 = sbr.rel (%p48) target = $region33
    $region32: #{tpu_custom_call.1} parent=1 // pred_region
      %vm51 = vcmask 0
      %52 = vst.msk [vmem:[#allocation2] sm:$0x1] %vm51, -1e+30
      %53 = vst.msk [vmem:[#allocation3] sm:$0x1] %vm51, 0.0
      %54 = vst [vmem:[#allocation4] sm:$0x1] 0.0
    $region33: #{tpu_custom_call.1} parent=1 // pred_fallthru
      _
    %v55 = vld [vmem:[#allocation5] sm:$0xff]
    %v56 = vld [vmem:[%s1] sm:$0x1]
    %v58 = vlaneseq
    %v59 = vshrl.u32 %v58, 7
    %v60 = vsub.s32 0, %v59
    %v61 = vrot.slane %v56, %v60
    %v63 = vadd.f32 %v55, %v61
    %v64 = vld [vmem:[#allocation8] sm:$0xff]
    %v65 = vld [vmem:[#allocation8 + $0x8] sm:$0xff]
    %v66 = vld [vmem:[#allocation8 + $0x10] sm:$0xff]
    %v67 = vld [vmem:[#allocation8 + $0x18] sm:$0xff]
    %v68 = vld [vmem:[#allocation8 + $0x20] sm:$0xff]
    %v69 = vld [vmem:[#allocation8 + $0x28] sm:$0xff]
    %v70 = vld [vmem:[#allocation8 + $0x30] sm:$0xff]
    %v71 = vld [vmem:[#allocation8 + $0x38] sm:$0xff]
    %v72 = vld [vmem:[#allocation8 + $0x40] sm:$0xff]
    %v73 = vld [vmem:[#allocation8 + $0x48] sm:$0xff]
    %v74 = vld [vmem:[#allocation8 + $0x50] sm:$0xff]
    %v75 = vld [vmem:[#allocation8 + $0x58] sm:$0xff]
    %v76 = vld [vmem:[#allocation8 + $0x60] sm:$0xff]
    %v77 = vld [vmem:[#allocation8 + $0x68] sm:$0xff]
    %v78 = vld [vmem:[#allocation8 + $0x70] sm:$0xff]
    %v79 = vld [vmem:[#allocation8 + $0x78] sm:$0xff]
    %v80 = vld [vmem:[%s3] sm:$0x1]
    %v82 = vlaneseq
    %v83 = vshrl.u32 %v82, 7
    %v84 = vsub.s32 0, %v83
    %v85 = vrot.slane %v80, %v84
    %87 = vmatprep.subr.mxu0 0.0
    %88 = vmatpush1.xpose.msra.mxu0 %v64
    %89 = vmatprep.subr.mxu0 0.0
    %90 = vmatpush1.xpose.msra.mxu0 %v65
    %91 = vmatprep.subr.mxu0 0.0
    %92 = vmatpush1.xpose.msra.mxu0 %v66
    %93 = vmatprep.subr.mxu0 0.0
    %94 = vmatpush1.xpose.msra.mxu0 %v67
    %95 = vmatprep.subr.mxu0 0.0
    %96 = vmatpush1.xpose.msra.mxu0 %v68
    %97 = vmatprep.subr.mxu0 0.0
    %98 = vmatpush1.xpose.msra.mxu0 %v69
    %99 = vmatprep.subr.mxu0 0.0
    %100 = vmatpush1.xpose.msra.mxu0 %v70
    %101 = vmatprep.subr.mxu0 0.0
    %102 = vmatpush1.xpose.msra.mxu0 %v71
    %103 = vmatprep.subr.mxu0 0.0
    %104 = vmatpush1.xpose.msra.mxu0 %v72
    %105 = vmatprep.subr.mxu0 0.0
    %106 = vmatpush1.xpose.msra.mxu0 %v73
    %107 = vmatprep.subr.mxu0 0.0
    %108 = vmatpush1.xpose.msra.mxu0 %v74
    %109 = vmatprep.subr.mxu0 0.0
    %110 = vmatpush1.xpose.msra.mxu0 %v75
    %111 = vmatprep.subr.mxu0 0.0
    %112 = vmatpush1.xpose.msra.mxu0 %v76
    %113 = vmatprep.subr.mxu0 0.0
    %114 = vmatpush1.xpose.msra.mxu0 %v77
    %115 = vmatprep.subr.mxu0 0.0
    %116 = vmatpush1.xpose.msra.mxu0 %v78
    %117 = vmatprep.subr.mxu0 0.0
    %118 = vmatpush1.xpose.msra.mxu0 %v79
    %119 = vmatprep.subr.mxu0 0.0
    %120 = vmatpush1.xpose.msra.mxu0 0.0
    %121 = vmatprep.subr.mxu0 0.0
    %122 = vmatpush1.xpose.msra.mxu0 0.0
    %123 = vmatprep.subr.mxu0 0.0
    %124 = vmatpush1.xpose.msra.mxu0 0.0
    %125 = vmatprep.subr.mxu0 0.0
    %126 = vmatpush1.xpose.msra.mxu0 0.0
    %127 = vmatprep.subr.mxu0 0.0
    %128 = vmatpush1.xpose.msra.mxu0 0.0
    %129 = vmatprep.subr.mxu0 0.0
    %130 = vmatpush1.xpose.msra.mxu0 0.0
    %131 = vmatprep.subr.mxu0 0.0
    %132 = vmatpush1.xpose.msra.mxu0 0.0
    %133 = vmatprep.subr.mxu0 0.0
    %134 = vmatpush1.xpose.msra.mxu0 0.0
    %135 = vmatprep.subr.mxu0 0.0
    %136 = vmatpush1.xpose.msra.mxu0 0.0
    %137 = vmatprep.subr.mxu0 0.0
    %138 = vmatpush1.xpose.msra.mxu0 0.0
    %139 = vmatprep.subr.mxu0 0.0
    %140 = vmatpush1.xpose.msra.mxu0 0.0
    %141 = vmatprep.subr.mxu0 0.0
    %142 = vmatpush1.xpose.msra.mxu0 0.0
    %143 = vmatprep.subr.mxu0 0.0
    %144 = vmatpush1.xpose.msra.mxu0 0.0
    %145 = vmatprep.subr.mxu0 0.0
    %146 = vmatpush1.xpose.msra.mxu0 0.0
    %147 = vmatprep.subr.mxu0 0.0
    %148 = vmatpush1.xpose.msra.mxu0 0.0
    %149 = vmatprep.subr.mxu0 0.0
    %150 = vmatpush1.xpose.msra.mxu0 0.0
    %151 = vmatprep.mubr.f32.mxu0 0.0
    %152 = vmatmul.mubr.f32.gmra.mrb[0].mxu0 %v63
    %v153 = vpop.f32.mrb[0].mxu0
    %v154 = vadd.f32 %v85, %v153
    %v155 = vpop.f32.mrb[0].mxu0
    %156 = vdwg.mxu0
    %v157 = vtanh.pop %v154
    %v158 = vld [vmem:[%s4] sm:$0x1]
    %159 = vmatprep.subr.mxu0 0.0
    %160 = vmatpush1.xpose.msra.mxu0 %v157
    %161 = vmatprep.subr.mxu0 0.0
    %162 = vmatpush1.xpose.msra.mxu0 0.0
    %163 = vmatprep.subr.mxu0 0.0
    %164 = vmatpush1.xpose.msra.mxu0 0.0
    %165 = vmatprep.subr.mxu0 0.0
    %166 = vmatpush1.xpose.msra.mxu0 0.0
    %167 = vmatprep.subr.mxu0 0.0
    %168 = vmatpush1.xpose.msra.mxu0 0.0
    %169 = vmatprep.subr.mxu0 0.0
    %170 = vmatpush1.xpose.msra.mxu0 0.0
    %171 = vmatprep.subr.mxu0 0.0
    %172 = vmatpush1.xpose.msra.mxu0 0.0
    %173 = vmatprep.subr.mxu0 0.0
    %174 = vmatpush1.xpose.msra.mxu0 0.0
    %175 = vmatprep.subr.mxu0 0.0
    %176 = vmatpush1.xpose.msra.mxu0 0.0
    %177 = vmatprep.subr.mxu0 0.0
    %178 = vmatpush1.xpose.msra.mxu0 0.0
    %179 = vmatprep.subr.mxu0 0.0
    %180 = vmatpush1.xpose.msra.mxu0 0.0
    %181 = vmatprep.subr.mxu0 0.0
    %182 = vmatpush1.xpose.msra.mxu0 0.0
    %183 = vmatprep.subr.mxu0 0.0
    %184 = vmatpush1.xpose.msra.mxu0 0.0
    %185 = vmatprep.subr.mxu0 0.0
    %186 = vmatpush1.xpose.msra.mxu0 0.0
    %187 = vmatprep.subr.mxu0 0.0
    %188 = vmatpush1.xpose.msra.mxu0 0.0
    %189 = vmatprep.subr.mxu0 0.0
    %190 = vmatpush1.xpose.msra.mxu0 0.0
    %191 = vmatprep.subr.mxu0 0.0
    %192 = vmatpush1.xpose.msra.mxu0 0.0
    %193 = vmatprep.subr.mxu0 0.0
    %194 = vmatpush1.xpose.msra.mxu0 0.0
    %195 = vmatprep.subr.mxu0 0.0
    %196 = vmatpush1.xpose.msra.mxu0 0.0
    %197 = vmatprep.subr.mxu0 0.0
    %198 = vmatpush1.xpose.msra.mxu0 0.0
    %199 = vmatprep.subr.mxu0 0.0
    %200 = vmatpush1.xpose.msra.mxu0 0.0
    %201 = vmatprep.subr.mxu0 0.0
    %202 = vmatpush1.xpose.msra.mxu0 0.0
    %203 = vmatprep.subr.mxu0 0.0
    %204 = vmatpush1.xpose.msra.mxu0 0.0
    %205 = vmatprep.subr.mxu0 0.0
    %206 = vmatpush1.xpose.msra.mxu0 0.0
    %207 = vmatprep.subr.mxu0 0.0
    %208 = vmatpush1.xpose.msra.mxu0 0.0
    %209 = vmatprep.subr.mxu0 0.0
    %210 = vmatpush1.xpose.msra.mxu0 0.0
    %211 = vmatprep.subr.mxu0 0.0
    %212 = vmatpush1.xpose.msra.mxu0 0.0
    %213 = vmatprep.subr.mxu0 0.0
    %214 = vmatpush1.xpose.msra.mxu0 0.0
    %215 = vmatprep.subr.mxu0 0.0
    %216 = vmatpush1.xpose.msra.mxu0 0.0
    %217 = vmatprep.subr.mxu0 0.0
    %218 = vmatpush1.xpose.msra.mxu0 0.0
    %219 = vmatprep.subr.mxu0 0.0
    %220 = vmatpush1.xpose.msra.mxu0 0.0
    %221 = vmatprep.subr.mxu0 0.0
    %222 = vmatpush1.xpose.msra.mxu0 0.0
    %223 = vmatprep.mubr.f32.mxu0 0.0
    %224 = vmatmul.mubr.f32.gmra.mrb[0].mxu0 %v158
    %v225 = vpop.f32.mrb[0].mxu0
    %v226 = vadd.f32 0.0, %v225
    %v227 = vpop.f32.mrb[0].mxu0
    %228 = vdwg.mxu0
    %v229 = vlaneseq
    %v230 = vand.u32 %v229, 127
    %s231 = smul.u32 0, 8
    %v232 = vstv %s231
    %v233 = vadd.s32 %v232, %v230
    %vm234 = vcmp.lt.s32.totalorder %v233, 8
    %v235 = vsel %vm234, %v226, -1e+30
    %v236 = vld [vmem:[#allocation2] sm:$0x1]
    %vm237 = vcmask 57344
    %v238 = vsel %vm237, %v235, -inf
    %239 = vmax.xlane.f32.xlu0 %v238
    %v240 = vpop.xlane.xlu0 %239
    %v241 = vmax.f32 %v236, %v240
    %v242 = vsub.f32 %v236, %v241
    %v243 = vmul.f32 %v242, 1.442695
    %v244 = vpow.pop %v243
    %246 = vset.pattern.permute.xlu0 0
    %247 = vperm.xlu0 %246, %v241
    %v248 = vpop.permute.xlu0 %247
    %v250 = vlaneseq
    %v251 = vshrl.u32 %v250, 7
    %v252 = vsub.s32 0, %v251
    %v253 = vrot.slane %v248, %v252
    %v254 = vsub.f32 %v235, %v253
    %v255 = vmul.f32 %v254, 1.442695
    %v256 = vpow.pop %v255
    %v257 = vld [vmem:[#allocation3] sm:$0x1]
    %v258 = vmul.f32 %v244, %v257
    %v259 = vsel %vm237, %v256, 0.0
    %260 = vadd.xlane.f32.xlu0 %v259
    %v261 = vpop.xlane.xlu0 %260
    %v262 = vadd.f32 %v258, %v261
    %vm263 = vcmask 0
    %264 = vst.msk [vmem:[#allocation3] sm:$0x1] %vm263, %v262
    %v265 = vld [vmem:[#allocation4] sm:$0x1]
    %267 = vset.pattern.permute.xlu0 0
    %268 = vperm.xlu0 %267, %v244
    %v269 = vpop.permute.xlu0 %268
    %v271 = vlaneseq
    %v272 = vshrl.u32 %v271, 7
    %v273 = vsub.s32 0, %v272
    %v274 = vrot.slane %v269, %v273
    %v275 = vmul.f32 %v274, %v265
    %vm276 = vcmask 64512
    %v278 = vsel %vm276, %v256, 0
    %280 = vmatprep.subr.mxu0 0.0
    %281 = vmatpush1.msra.mxu0 %v55
    %282 = vmatprep.subr.mxu0 0.0
    %283 = vmatpush1.msra.mxu0 0.0
    %284 = vmatprep.subr.mxu0 0.0
    %285 = vmatpush1.msra.mxu0 0.0
    %286 = vmatprep.subr.mxu0 0.0
    %287 = vmatpush1.msra.mxu0 0.0
    %288 = vmatprep.subr.mxu0 0.0
    %289 = vmatpush1.msra.mxu0 0.0
    %290 = vmatprep.subr.mxu0 0.0
    %291 = vmatpush1.msra.mxu0 0.0
    %292 = vmatprep.subr.mxu0 0.0
    %293 = vmatpush1.msra.mxu0 0.0
    %294 = vmatprep.subr.mxu0 0.0
    %295 = vmatpush1.msra.mxu0 0.0
    %296 = vmatprep.subr.mxu0 0.0
    %297 = vmatpush1.msra.mxu0 0.0
    %298 = vmatprep.subr.mxu0 0.0
    %299 = vmatpush1.msra.mxu0 0.0
    %300 = vmatprep.subr.mxu0 0.0
    %301 = vmatpush1.msra.mxu0 0.0
    %302 = vmatprep.subr.mxu0 0.0
    %303 = vmatpush1.msra.mxu0 0.0
    %304 = vmatprep.subr.mxu0 0.0
    %305 = vmatpush1.msra.mxu0 0.0
    %306 = vmatprep.subr.mxu0 0.0
    %307 = vmatpush1.msra.mxu0 0.0
    %308 = vmatprep.subr.mxu0 0.0
    %309 = vmatpush1.msra.mxu0 0.0
    %310 = vmatprep.subr.mxu0 0.0
    %311 = vmatpush1.msra.mxu0 0.0
    %312 = vmatprep.subr.mxu0 0.0
    %313 = vmatpush1.msra.mxu0 0.0
    %314 = vmatprep.subr.mxu0 0.0
    %315 = vmatpush1.msra.mxu0 0.0
    %316 = vmatprep.subr.mxu0 0.0
    %317 = vmatpush1.msra.mxu0 0.0
    %318 = vmatprep.subr.mxu0 0.0
    %319 = vmatpush1.msra.mxu0 0.0
    %320 = vmatprep.subr.mxu0 0.0
    %321 = vmatpush1.msra.mxu0 0.0
    %322 = vmatprep.subr.mxu0 0.0
    %323 = vmatpush1.msra.mxu0 0.0
    %324 = vmatprep.subr.mxu0 0.0
    %325 = vmatpush1.msra.mxu0 0.0
    %326 = vmatprep.subr.mxu0 0.0
    %327 = vmatpush1.msra.mxu0 0.0
    %328 = vmatprep.subr.mxu0 0.0
    %329 = vmatpush1.msra.mxu0 0.0
    %330 = vmatprep.subr.mxu0 0.0
    %331 = vmatpush1.msra.mxu0 0.0
    %332 = vmatprep.subr.mxu0 0.0
    %333 = vmatpush1.msra.mxu0 0.0
    %334 = vmatprep.subr.mxu0 0.0
    %335 = vmatpush1.msra.mxu0 0.0
    %336 = vmatprep.subr.mxu0 0.0
    %337 = vmatpush1.msra.mxu0 0.0
    %338 = vmatprep.subr.mxu0 0.0
    %339 = vmatpush1.msra.mxu0 0.0
    %340 = vmatprep.subr.mxu0 0.0
    %341 = vmatpush1.msra.mxu0 0.0
    %342 = vmatprep.subr.mxu0 0.0
    %343 = vmatpush1.msra.mxu0 0.0
    %344 = vmatprep.mubr.f32.mxu0 0.0
    %345 = vmatmul.mubr.f32.gmra.mrb[0].mxu0 %v278
    %v346 = vpop.f32.mrb[0].mxu0
    %v347 = vadd.f32 0.0, %v346
    %v348 = vpop.f32.mrb[0].mxu0
    %349 = vdwg.mxu0
    %v350 = vadd.f32 %v275, %v347
    %351 = vst [vmem:[#allocation4] sm:$0x1] %v350
    %352 = vst.msk [vmem:[#allocation2] sm:$0x1] %vm263, %v241
    // Predicated region
    $region34: #{tpu_custom_call.1} parent=1 // pred_check
      %p353 = pneg %p47
    $region35: #{tpu_custom_call.1} parent=1 // pred_check_branch
      %355 = sbr.rel (%p353) target = $region37
    $region36: #{tpu_custom_call.1} parent=1 // pred_region
      %v356 = vld [vmem:[#allocation3] sm:$0x1]
      %v357 = vrcp.pop %v356
      %v358 = vmul.f32 %v356, %v357
      %v359 = vsub.f32 2.0, %v358
      %v360 = vmul.f32 %v357, %v359
      %v361 = vld [vmem:[#allocation4] sm:$0x1]
      %363 = vset.pattern.permute.xlu0 0
      %364 = vperm.xlu0 %363, %v360
      %v365 = vpop.permute.xlu0 %364
      %v367 = vlaneseq
      %v368 = vshrl.u32 %v367, 7
      %v369 = vsub.s32 0, %v368
      %v370 = vrot.slane %v365, %v369
      %v371 = vmul.f32 %v361, %v370
      %372 = vst [vmem:[#allocation10] sm:$0x1] %v371
    $region37: #{tpu_custom_call.1} parent=1 // pred_fallthru
      _
    // Predicated region
    $region38: #{tpu_custom_call.1} parent=1 // pred_check
      _
    $region39: #{tpu_custom_call.1} parent=1 // pred_check_branch
      %374 = sbr.rel (0) target = $region41
    $region40: #{tpu_custom_call.1} parent=1 // pred_region
      %s376 = ssub.s32 16, 16
      %377 = vsyncadd [#allocation7], %s376
      %s379 = sshll.u32 [#allocation10], 4
      %s380 = int_to_ptr.vmem [resolvable:$true] %s379
      %382 = dma.vmem_to_hbm [thread:$0]  %s380, 16, %s5, [#allocation7]
    $region41: #{tpu_custom_call.1} parent=1 // pred_fallthru
      _
    // Predicated region
    $region42: #{tpu_custom_call.1} parent=1 // pred_check
      _
    $region43: #{tpu_custom_call.1} parent=1 // pred_check_branch
      %384 = sbr.rel (0) target = $region45
    $region44: #{tpu_custom_call.1} parent=1 // pred_region
      %385 = dma.done [#allocation7], 16
    $region45: #{tpu_custom_call.1} parent=1 // pred_fallthru
      _
    %386 = vsyncpa [#allocation6], 1
    %387 = vsyncpa [#allocation9], 1
    %388 = vsyncpa [#allocation7], 1

</llo_original>
